<compile_context>
chip_gen: v7x
topology: tpu7x:2x2x1
jax: 0.10.0
libtpu: 0.0.40
codegen_flags: <defaults>
</compile_context>

<pallas_src>
import jax
import jax.numpy as jnp
from jax.experimental import pallas as pl
from jax.experimental.pallas import tpu as pltpu

EPS = 1e-5


def prenorm_kernel(x_ref, w_ref, wrow_ref, wb_ref, o_ref):
    # x: (1, C, T)   w: (Cout, C)   wrow, wb: (Cout, 1) f32   o: (1, Cout, T)
    x = x_ref[0]                                             # (C, T), input dtype
    xf = x.astype(jnp.float32)
    c = xf.shape[0]
    inv_c = jnp.float32(1.0 / c)

    # One-pass per-pixel channel stats (biased variance, matching unbiased=False), f32.
    mean = jnp.sum(xf, axis=0, keepdims=True) * inv_c        # (1, T)
    ex2 = jnp.sum(xf * xf, axis=0, keepdims=True) * inv_c    # (1, T)
    var = jnp.maximum(ex2 - mean * mean, 0.0)                # clamp: one-pass var can dip < 0
    s = jax.lax.rsqrt(var + EPS)                             # (1, T)

    # MXU on raw x; ChanNorm applied as a post-matmul correction:
    #   W @ ((x - mean) * s) + wb  ==  (W @ x) * s - (mean * s) * rowsum(W) + wb
    y = jnp.dot(w_ref[...], x.astype(w_ref.dtype),
                preferred_element_type=jnp.float32)          # (Cout, T), f32 accumulation
    o_ref[0] = (y * s - (mean * s) * wrow_ref[...] + wb_ref[...]).astype(o_ref.dtype)


def _vmem_capacity_bytes():
    try:
        return int(pltpu.get_tpu_info().vmem_capacity_bytes)
    except Exception:
        return 64 << 20   # conservative fallback (v7x per-TC VMEM)


def _pick_tile_hw(hw_pad, n, c, cout, x_bytes, out_bytes, vmem_cap):
    """Largest 128-multiple power-of-two tile dividing hw_pad that fits the block budget,
    then capped so the grid keeps enough steps for megacore pipelining (v7x)."""
    budget = vmem_cap // 5   # ~12.8 MiB of blocks on 64 MiB VMEM, ~25.6 MiB on 128 MiB
    # Per-lane bytes: double-buffered in/out DMA blocks + in-kernel f32 temporaries
    # (x upcast + f32 matmul accumulator).
    per_lane = 2 * (c * x_bytes + cout * out_bytes) + 4 * (c + cout)
    max_t = max(128, (budget // max(per_lane, 1)) // 128 * 128)
    best, t = 128, 128
    while t <= hw_pad and t <= max_t:
        if hw_pad % t == 0:
            best = t
        t *= 2
    # Keep >= 8 grid steps when possible so both v7x TensorCores + the pipeline stay busy.
    while best > 128 and n * (hw_pad // best) < 8 and hw_pad % (best // 2) == 0:
        best //= 2
    return best


def prenorm(x_nchw, g, b, conv_w, conv_b, *, tile_hw=None, force_bf16_matmul=False):
    """x_nchw: (N, C, H, W).  g, b: ChanNorm params (C,).  conv_w: (Cout, C).  conv_b: (Cout,)."""
    N, C, H, W = x_nchw.shape
    Cout = conv_w.shape[0]
    HW = H * W
    x3 = x_nchw.reshape(N, C, HW)

    # Pad H*W to a multiple of 128: lane-dense, VMEM-budgeted tiles at any resolution.
    # (Stats are per-pixel over C, so zero-padded pixels are independent and sliced off.)
    HW_pad = -(-HW // 128) * 128
    if HW_pad != HW:
        x3 = jnp.pad(x3, ((0, 0), (0, 0), (0, HW_pad - HW)))

    # Fold ChanNorm's affine into the 1x1 conv:  W@(n*g + b) + cb = (W*g)@n + (W@b + cb)
    gf = g.reshape(-1).astype(jnp.float32)
    bf = b.reshape(-1).astype(jnp.float32)
    wf = conv_w.astype(jnp.float32)
    w_fold_f32 = wf * gf[None, :]                                      # (Cout, C)
    wb_fold = (conv_b.astype(jnp.float32) + wf @ bf).reshape(Cout, 1)  # (Cout, 1), f32

    # MXU operand dtype: bf16 when activations are bf16 (or forced); accumulation stays f32.
    mm_dtype = (jnp.bfloat16
                if (x_nchw.dtype == jnp.bfloat16 or force_bf16_matmul)
                else jnp.float32)
    w_fold = w_fold_f32.astype(mm_dtype)
    # Row sums of the *rounded* MXU weights so the mean correction cancels exactly.
    w_rowsum = jnp.sum(w_fold.astype(jnp.float32), axis=1).reshape(Cout, 1)

    vmem_cap = _vmem_capacity_bytes()
    if tile_hw is None:
        itemsize = jnp.dtype(x_nchw.dtype).itemsize
        tile_hw = _pick_tile_hw(HW_pad, N, C, Cout, itemsize, itemsize, vmem_cap)
    assert HW_pad % tile_hw == 0, "tile_hw must divide the padded H*W"

    grid = (N, HW_pad // tile_hw)

    # Weights/bias use a constant index_map; Mosaic keeps them resident across steps.
    out3 = pl.pallas_call(
        prenorm_kernel,
        out_shape=jax.ShapeDtypeStruct((N, Cout, HW_pad), x_nchw.dtype),
        grid_spec=pltpu.PrefetchScalarGridSpec(
            num_scalar_prefetch=0,
            grid=grid,
            in_specs=[
                pl.BlockSpec((1, C, tile_hw), lambda n, t: (n, 0, t)),
                pl.BlockSpec((Cout, C), lambda n, t: (0, 0)),
                pl.BlockSpec((Cout, 1), lambda n, t: (0, 0)),
                pl.BlockSpec((Cout, 1), lambda n, t: (0, 0)),
            ],
            out_specs=pl.BlockSpec((1, Cout, tile_hw), lambda n, t: (n, 0, t)),
        ),
        compiler_params=pltpu.CompilerParams(
            dimension_semantics=("parallel", "parallel"),
            vmem_limit_bytes=int(vmem_cap // 2)),   # 32 MiB on v7x, 64 MiB on v5e/v6e
    )(x3, w_fold, w_rowsum, wb_fold)

    if HW_pad != HW:
        out3 = out3[:, :, :HW]
    return out3.reshape(N, Cout, H, W)


def prenorm_ref(x, g, b, conv_w, conv_b):
    # Pure-JAX reference (matches the PyTorch PreNorm(ChanNorm) + Conv2d(1x1)).
    xf = x.astype(jnp.float32)
    mean = jnp.mean(xf, axis=1, keepdims=True)
    var = jnp.mean((xf - mean) ** 2, axis=1, keepdims=True)
    normed = (xf - mean) / jnp.sqrt(var + EPS)
    normed = normed * g.reshape(1, -1, 1, 1).astype(jnp.float32) \
                    + b.reshape(1, -1, 1, 1).astype(jnp.float32)
    y = jnp.einsum("oc,nchw->nohw", conv_w.astype(jnp.float32), normed)
    return y + conv_b.reshape(1, -1, 1, 1).astype(jnp.float32)


if __name__ == "__main__":
    key = jax.random.PRNGKey(0)

    # ---- f32 path (strict tolerance, auto tile, megacore-friendly grid) ----
    N, C, H, W = 2, 4, 16, 16
    kx, kw, kb = jax.random.split(key, 3)
    x = jax.random.normal(kx, (N, C, H, W), dtype=jnp.float32)
    g = jnp.ones((C,), jnp.float32)          # ChanNorm g = ones(1, dim, 1, 1)
    b = jnp.zeros((C,), jnp.float32)         # ChanNorm b = zeros(1, dim, 1, 1)
    conv_w = jax.random.normal(kw, (C, C), dtype=jnp.float32) * 0.1
    conv_b = jax.random.normal(kb, (C,), dtype=jnp.float32) * 0.1

    out = prenorm(x, g, b, conv_w, conv_b)
    jax.block_until_ready(out)
    ref = prenorm_ref(x, g, b, conv_w, conv_b)
    assert jnp.allclose(out, ref, atol=1e-4, rtol=1e-4), "f32 mismatch vs reference"

    # ---- bf16 path, forced multi-tile HW grid (exercises lane tiling + bf16 MXU) ----
    N2, C2, H2, W2 = 2, 8, 16, 16
    kx2, kw2, kb2, kg2, kbb2 = jax.random.split(jax.random.PRNGKey(1), 5)
    x2 = jax.random.normal(kx2, (N2, C2, H2, W2), dtype=jnp.float32).astype(jnp.bfloat16)
    g2 = 1.0 + 0.1 * jax.random.normal(kg2, (C2,), dtype=jnp.float32)
    b2 = 0.1 * jax.random.normal(kbb2, (C2,), dtype=jnp.float32)
    conv_w2 = jax.random.normal(kw2, (C2, C2), dtype=jnp.float32) * 0.1
    conv_b2 = jax.random.normal(kb2, (C2,), dtype=jnp.float32) * 0.1

    out2 = prenorm(x2, g2, b2, conv_w2, conv_b2, tile_hw=128)   # grid = (2, 2)
    jax.block_until_ready(out2)
    ref2 = prenorm_ref(x2, g2, b2, conv_w2, conv_b2)
    assert jnp.allclose(out2.astype(jnp.float32), ref2, atol=3e-2, rtol=3e-2), \
        "bf16 mismatch vs reference"

    print("KERNEL_OK")
</pallas_src>

<mosaic_0001>
module attributes {stable_mosaic.version = 11 : i64} {
  func.func @prenorm_kernel(%arg0: i32, %arg1: i32, %arg2: memref<1x4x128xf32, #tpu.memory_space<vmem>>, %arg3: memref<4x4xf32, #tpu.memory_space<vmem>>, %arg4: memref<4x1xf32, #tpu.memory_space<vmem>>, %arg5: memref<4x1xf32, #tpu.memory_space<vmem>>, %arg6: memref<1x4x128xf32, #tpu.memory_space<vmem>>) attributes {dimension_semantics = [#tpu.dimension_semantics<parallel>, #tpu.dimension_semantics<parallel>], iteration_bounds = array<i64: 2, 2>, scalar_prefetch = 0 : i64, scratch_operands = 0 : i64, tpu.core_type = #tpu.core_type<tc>, window_params = [{transform_indices = @transform_0, window_bounds = array<i64: 1, 4, 128>}, {pipeline_mode = #tpu.pipeline_mode<synchronous>, transform_indices = @transform_1, window_bounds = array<i64: 4, 4>}, {pipeline_mode = #tpu.pipeline_mode<synchronous>, transform_indices = @transform_2, window_bounds = array<i64: 4, 1>}, {pipeline_mode = #tpu.pipeline_mode<synchronous>, transform_indices = @transform_3, window_bounds = array<i64: 4, 1>}, {transform_indices = @transform_4, window_bounds = array<i64: 1, 4, 128>}]} {
    %c0 = arith.constant 0 : index
    %c0_0 = arith.constant 0 : index
    %c0_1 = arith.constant 0 : index
    %0 = vector.load %arg2[%c0, %c0_0, %c0_1] : memref<1x4x128xf32, #tpu.memory_space<vmem>>, vector<1x4x128xf32>
    %1 = vector.shape_cast %0 : vector<1x4x128xf32> to vector<4x128xf32>
    %cst = arith.constant dense<0.000000e+00> : vector<128xf32>
    %2 = vector.multi_reduction <add>, %1, %cst [0] : vector<4x128xf32> to vector<128xf32>
    %3 = vector.shape_cast %2 : vector<128xf32> to vector<1x128xf32>
    %cst_2 = arith.constant 2.500000e-01 : f32
    %4 = vector.broadcast %cst_2 : f32 to vector<1x128xf32>
    %5 = arith.mulf %3, %4 : vector<1x128xf32>
    %6 = arith.mulf %1, %1 : vector<4x128xf32>
    %cst_3 = arith.constant dense<0.000000e+00> : vector<128xf32>
    %7 = vector.multi_reduction <add>, %6, %cst_3 [0] : vector<4x128xf32> to vector<128xf32>
    %8 = vector.shape_cast %7 : vector<128xf32> to vector<1x128xf32>
    %cst_4 = arith.constant 2.500000e-01 : f32
    %9 = vector.broadcast %cst_4 : f32 to vector<1x128xf32>
    %10 = arith.mulf %8, %9 : vector<1x128xf32>
    %11 = arith.mulf %5, %5 : vector<1x128xf32>
    %12 = arith.subf %10, %11 : vector<1x128xf32>
    %cst_5 = arith.constant 0.000000e+00 : f32
    %13 = vector.broadcast %cst_5 : f32 to vector<1x128xf32>
    %14 = arith.maximumf %12, %13 : vector<1x128xf32>
    %cst_6 = arith.constant 9.99999974E-6 : f32
    %15 = vector.broadcast %cst_6 : f32 to vector<1x128xf32>
    %16 = arith.addf %14, %15 : vector<1x128xf32>
    %17 = math.rsqrt %16 : vector<1x128xf32>
    %c0_7 = arith.constant 0 : index
    %c0_8 = arith.constant 0 : index
    %18 = vector.load %arg3[%c0_7, %c0_8] : memref<4x4xf32, #tpu.memory_space<vmem>>, vector<4x4xf32>
    %cst_9 = arith.constant dense<0.000000e+00> : vector<4x128xf32>
    %19 = tpu.matmul %18, %1, %cst_9 {dimension_numbers = #tpu.dot_dimension_numbers<[1], [0], [0], [1], [0, 0, 1, 1], [], []>} : vector<4x4xf32>, vector<4x128xf32>, vector<4x128xf32> -> vector<4x128xf32>
    %20 = vector.broadcast %17 : vector<1x128xf32> to vector<4x128xf32>
    %21 = arith.mulf %19, %20 : vector<4x128xf32>
    %22 = arith.mulf %5, %17 : vector<1x128xf32>
    %c0_10 = arith.constant 0 : index
    %c0_11 = arith.constant 0 : index
    %23 = vector.load %arg4[%c0_10, %c0_11] : memref<4x1xf32, #tpu.memory_space<vmem>>, vector<4x1xf32>
    %24 = vector.broadcast %22 : vector<1x128xf32> to vector<4x128xf32>
    %25 = vector.broadcast %23 : vector<4x1xf32> to vector<4x128xf32>
    %26 = arith.mulf %24, %25 : vector<4x128xf32>
    %27 = arith.subf %21, %26 : vector<4x128xf32>
    %c0_12 = arith.constant 0 : index
    %c0_13 = arith.constant 0 : index
    %28 = vector.load %arg5[%c0_12, %c0_13] : memref<4x1xf32, #tpu.memory_space<vmem>>, vector<4x1xf32>
    %29 = vector.broadcast %28 : vector<4x1xf32> to vector<4x128xf32>
    %30 = arith.addf %27, %29 : vector<4x128xf32>
    %c0_14 = arith.constant 0 : index
    %c0_15 = arith.constant 0 : index
    %c0_16 = arith.constant 0 : index
    %31 = vector.load %arg6[%c0_14, %c0_15, %c0_16] : memref<1x4x128xf32, #tpu.memory_space<vmem>>, vector<1x4x128xf32>
    %32 = vector.shape_cast %31 : vector<1x4x128xf32> to vector<4x128xf32>
    %33 = vector.shape_cast %30 : vector<4x128xf32> to vector<1x4x128xf32>
    tpu.vector_store %arg6[%c0_14, %c0_15, %c0_16], %33 {strides = array<i32>} : memref<1x4x128xf32, #tpu.memory_space<vmem>>, vector<1x4x128xf32>,
    return
  }
  func.func @transform_0(%arg0: i32, %arg1: i32) -> (i32, i32, i32) {
    %c0_i32 = arith.constant 0 : i32
    %c0_i32_0 = arith.constant 0 : i32
    return %arg0, %c0_i32, %arg1 : i32, i32, i32
  }
  func.func @transform_1(%arg0: i32, %arg1: i32) -> (i32, i32) {
    %c0_i32 = arith.constant 0 : i32
    %c0_i32_0 = arith.constant 0 : i32
    %c0_i32_1 = arith.constant 0 : i32
    return %c0_i32, %c0_i32_0 : i32, i32
  }
  func.func @transform_2(%arg0: i32, %arg1: i32) -> (i32, i32) {
    %c0_i32 = arith.constant 0 : i32
    %c0_i32_0 = arith.constant 0 : i32
    %c0_i32_1 = arith.constant 0 : i32
    return %c0_i32, %c0_i32_0 : i32, i32
  }
  func.func @transform_3(%arg0: i32, %arg1: i32) -> (i32, i32) {
    %c0_i32 = arith.constant 0 : i32
    %c0_i32_0 = arith.constant 0 : i32
    %c0_i32_1 = arith.constant 0 : i32
    return %c0_i32, %c0_i32_0 : i32, i32
  }
  func.func @transform_4(%arg0: i32, %arg1: i32) -> (i32, i32, i32) {
    %c0_i32 = arith.constant 0 : i32
    %c0_i32_0 = arith.constant 0 : i32
    return %arg0, %c0_i32, %arg1 : i32, i32, i32
  }
}

</mosaic_0001>

<llo_original>
// kernel: tpu_custom_call.1
$region0: #{tpu_custom_call.1}
  #allocation0 [shape = 'u32[]', space=smem, size = 0x4, offset = 0x4, fixed_abs, tag = 'smem constant byte address 0x4 - core index']
  #allocation1 [shape = 'u32[144,128]{1,0:T(1,128)}', space=vmem, size = 0x12000, scoped, tag = 'internal scratch']
  %s0 = inlined_call_operand.hbm [shape: f32[2,4,256], index: 0, kind: input, shape index: {}]
  %s1 = inlined_call_operand.vmem [shape: f32[4,4], index: 1, kind: input, shape index: {}]
  %s2 = inlined_call_operand.vmem [shape: f32[4,1], index: 2, kind: input, shape index: {}]
  %s3 = inlined_call_operand.vmem [shape: f32[4,1], index: 3, kind: input, shape index: {}]
  %s4 = inlined_call_operand.hbm [shape: f32[2,4,256], index: 4, kind: output, shape index: {}]
  %s5 = sld [smem:[#allocation0]]
  $region53: #{tpu_custom_call.1} parent=0
    _
  %s7 = ssub.s32 1, %s5
  %s8 = scalar_select 0, %s7, %s5
  $region1: #{tpu_custom_call.1} parent=0
    #allocation2 [shape = 'u8[4096]{0}', space=vmem, size = 0x1000, scoped, tag = 'input window, operand 0']
    #allocation3 [shape = 's32[2]{0}', space=sflag, size = 0x8, scoped, tag = 'scoped memory for tpu_custom_call.1']
    #allocation4 [shape = 's32[2]{0}', space=sflag, size = 0x8, scoped, tag = 'scoped memory for tpu_custom_call.1']
    #allocation5 [shape = 'u8[4096]{0}', space=vmem, size = 0x1000, scoped, tag = 'output window, operand 0']
    %9 = vsyncpa [#allocation3], 0
    %s10 = scalar_lea.sflag [#allocation3], 1
    %11 = vsyncpa %s10, 0
    %12 = vsyncpa [#allocation4], 0
    %s13 = scalar_lea.sflag [#allocation4], 1
    %14 = vsyncpa %s13, 0
    loop: start=0, step=1, limit=6
    $region2: #{tpu_custom_call.1} parent=1 // loop_pre_header
      _
    $region3: #{tpu_custom_call.1} parent=1 // loop_header
      %s16 = sphi 0, %s20
      %p17 = scmp.ge.s32.totalorder %s16, 6
      %s23 = sphi 0, %s35
      %s24 = sphi 0, %s31
      %s25 = sphi 0, %s23
      %s26 = sphi 0, %s24
      %s27 = sphi 0, %s25
      %s28 = sphi 0, %s26
      %s40 = sphi 0, %s42
      %s43 = sphi 0, %s40
      %s44 = sphi 0, %s43
      %s60 = sphi 0, %s44
      %s64 = sphi 0, %s64
      %s66 = sphi 0, %s64
      %s67 = sphi 0, %s66
      %s81 = sphi 0, %s67
      %s85 = sphi 0, %s85
      %s87 = sphi 0, %s85
      %s88 = sphi 0, %s87
      %s102 = sphi 0, %s88
      %s106 = sphi 0, %s106
      %s108 = sphi 0, %s106
      %s109 = sphi 0, %s108
      %s123 = sphi 0, %s109
      %s131 = sphi 0, %s133
      %s134 = sphi 0, %s131
      %s135 = sphi 0, %s134
      %s151 = sphi 0, %s135
    $region4: #{tpu_custom_call.1} parent=1 // loop_header_branch
      %19 = sbr.rel (%p17) target = $region8
    $region5: #{tpu_custom_call.1} parent=1 // loop_body
      %s21 = ssub.s32 %s16, 1
      %s22 = ssub.s32 %s16, 2
      %s29 = sadd.s32 1, %s24
      %p30 = scmp.ge.s32.totalorder %s29, 2
      %s31 = scalar_select %p30, 0, %s29
      %s32 = sadd.s32 1, %s23
      %s33 = scalar_select %p30, %s32, %s23
      %p34 = scmp.ge.s32.totalorder %s33, 2
      %s35 = scalar_select %p34, 0, %s33
      %s36 = ssub.s32 %s23, %s35
      %s37 = ssub.s32 %s24, %s31
      %s38 = sor.u32 %s36, %s37
      %p39 = scmp.eq.s32.totalorder %s38, 0
      %s41 = sadd.s32 %s40, 1
      %s42 = scalar_select %p39, %s40, %s41
      %p45 = pneg %p39
      %p46 = scmp.eq.s32.totalorder %s16, 3
      %p47 = por %p45, %p46
      %p48 = scmp.ne.s32.totalorder %s40, %s43
      %p49 = scmp.eq.s32.totalorder %s16, 0
      %p50 = por %p48, %p49
      %p51 = scmp.ne.s32.totalorder %s40, %s43
      %p52 = scmp.eq.s32.totalorder %s21, 3
      %p53 = por %p51, %p52
      %p54 = scmp.ne.s32.totalorder %s43, %s44
      %p55 = scmp.eq.s32.totalorder %s21, 0
      %p56 = por %p54, %p55
      %p57 = scmp.ne.s32.totalorder %s43, %s44
      %p58 = scmp.eq.s32.totalorder %s22, 3
      %p59 = por %p57, %p58
      %p61 = scmp.ne.s32.totalorder %s44, %s60
      %p62 = scmp.eq.s32.totalorder %s22, 0
      %p63 = por %p61, %p62
      %s65 = sadd.s32 %s64, 1
      %p68 = scmp.eq.s32.totalorder %s16, 3
      %p69 = scmp.ne.s32.totalorder %s64, %s66
      %p70 = scmp.eq.s32.totalorder %s16, 0
      %p71 = por %p69, %p70
      %p72 = scmp.ne.s32.totalorder %s64, %s66
      %p73 = scmp.eq.s32.totalorder %s21, 3
      %p74 = por %p72, %p73
      %p75 = scmp.ne.s32.totalorder %s66, %s67
      %p76 = scmp.eq.s32.totalorder %s21, 0
      %p77 = por %p75, %p76
      %p78 = scmp.ne.s32.totalorder %s66, %s67
      %p79 = scmp.eq.s32.totalorder %s22, 3
      %p80 = por %p78, %p79
      %p82 = scmp.ne.s32.totalorder %s67, %s81
      %p83 = scmp.eq.s32.totalorder %s22, 0
      %p84 = por %p82, %p83
      %s86 = sadd.s32 %s85, 1
      %p89 = scmp.eq.s32.totalorder %s16, 3
      %p90 = scmp.ne.s32.totalorder %s85, %s87
      %p91 = scmp.eq.s32.totalorder %s16, 0
      %p92 = por %p90, %p91
      %p93 = scmp.ne.s32.totalorder %s85, %s87
      %p94 = scmp.eq.s32.totalorder %s21, 3
      %p95 = por %p93, %p94
      %p96 = scmp.ne.s32.totalorder %s87, %s88
      %p97 = scmp.eq.s32.totalorder %s21, 0
      %p98 = por %p96, %p97
      %p99 = scmp.ne.s32.totalorder %s87, %s88
      %p100 = scmp.eq.s32.totalorder %s22, 3
      %p101 = por %p99, %p100
      %p103 = scmp.ne.s32.totalorder %s88, %s102
      %p104 = scmp.eq.s32.totalorder %s22, 0
      %p105 = por %p103, %p104
      %s107 = sadd.s32 %s106, 1
      %p110 = scmp.eq.s32.totalorder %s16, 3
      %p111 = scmp.ne.s32.totalorder %s106, %s108
      %p112 = scmp.eq.s32.totalorder %s16, 0
      %p113 = por %p111, %p112
      %p114 = scmp.ne.s32.totalorder %s106, %s108
      %p115 = scmp.eq.s32.totalorder %s21, 3
      %p116 = por %p114, %p115
      %p117 = scmp.ne.s32.totalorder %s108, %s109
      %p118 = scmp.eq.s32.totalorder %s21, 0
      %p119 = por %p117, %p118
      %p120 = scmp.ne.s32.totalorder %s108, %s109
      %p121 = scmp.eq.s32.totalorder %s22, 3
      %p122 = por %p120, %p121
      %p124 = scmp.ne.s32.totalorder %s109, %s123
      %p125 = scmp.eq.s32.totalorder %s22, 0
      %p126 = por %p124, %p125
      %s127 = ssub.s32 %s23, %s35
      %s128 = ssub.s32 %s24, %s31
      %s129 = sor.u32 %s127, %s128
      %p130 = scmp.eq.s32.totalorder %s129, 0
      %s132 = sadd.s32 %s131, 1
      %s133 = scalar_select %p130, %s131, %s132
      %p136 = pneg %p130
      %p137 = scmp.eq.s32.totalorder %s16, 3
      %p138 = por %p136, %p137
      %p139 = scmp.ne.s32.totalorder %s131, %s134
      %p140 = scmp.eq.s32.totalorder %s16, 0
      %p141 = por %p139, %p140
      %p142 = scmp.ne.s32.totalorder %s131, %s134
      %p143 = scmp.eq.s32.totalorder %s21, 3
      %p144 = por %p142, %p143
      %p145 = scmp.ne.s32.totalorder %s134, %s135
      %p146 = scmp.eq.s32.totalorder %s21, 0
      %p147 = por %p145, %p146
      %p148 = scmp.ne.s32.totalorder %s134, %s135
      %p149 = scmp.eq.s32.totalorder %s22, 3
      %p150 = por %p148, %p149
      %p152 = scmp.ne.s32.totalorder %s135, %s151
      %p153 = scmp.eq.s32.totalorder %s22, 0
      %p154 = por %p152, %p153
      %p155 = scmp.le.s32.totalorder 1, %s16
      %p156 = scmp.lt.s32.totalorder %s16, 5
      %p157 = pnand %p155, %p156
      %p158 = pneg %p157
      // Predicated region
      $region9: #{tpu_custom_call.1} parent=5 // pred_check
        _
      $region10: #{tpu_custom_call.1} parent=5 // pred_check_branch
        %160 = sbr.rel (%p157) target = $region12
      $region11: #{tpu_custom_call.1} parent=5 // pred_region
        %s161 = ssub.s32 %s16, 1
        // Predicated region
        $region13: #{tpu_custom_call.1} parent=11 // pred_check
          %p162 = pneg %p77
        $region14: #{tpu_custom_call.1} parent=11 // pred_check_branch
          %164 = sbr.rel (%p162) target = $region16
        $region15: #{tpu_custom_call.1} parent=11 // pred_region
          _
        $region16: #{tpu_custom_call.1} parent=11 // pred_fallthru
          _
        // Predicated region
        $region17: #{tpu_custom_call.1} parent=11 // pred_check
          %p165 = pneg %p98
        $region18: #{tpu_custom_call.1} parent=11 // pred_check_branch
          %167 = sbr.rel (%p165) target = $region20
        $region19: #{tpu_custom_call.1} parent=11 // pred_region
          _
        $region20: #{tpu_custom_call.1} parent=11 // pred_fallthru
          _
        // Predicated region
        $region21: #{tpu_custom_call.1} parent=11 // pred_check
          %p168 = pneg %p119
        $region22: #{tpu_custom_call.1} parent=11 // pred_check_branch
          %170 = sbr.rel (%p168) target = $region24
        $region23: #{tpu_custom_call.1} parent=11 // pred_region
          _
        $region24: #{tpu_custom_call.1} parent=11 // pred_fallthru
          _
      $region12: #{tpu_custom_call.1} parent=5 // pred_fallthru
        _
      %p171 = scmp.lt.s32.totalorder %s16, 4
      // Predicated region
      $region25: #{tpu_custom_call.1} parent=5 // pred_check
        %p172 = pneg %p171
      $region26: #{tpu_custom_call.1} parent=5 // pred_check_branch
        %174 = sbr.rel (%p172) target = $region28
      $region27: #{tpu_custom_call.1} parent=5 // pred_region
        // Predicated region
        $region29: #{tpu_custom_call.1} parent=27 // pred_check
          %p175 = pneg %p50
        $region30: #{tpu_custom_call.1} parent=27 // pred_check_branch
          %177 = sbr.rel (%p175) target = $region32
        $region31: #{tpu_custom_call.1} parent=27 // pred_region
          %s178 = sand.u32 %s40, 1
          %s179 = scalar_lea.sflag [#allocation3], %s178
          %s180 = sand.u32 %s40, 1
          %s181 = smul.addr %s180, 4
          %s182 = scalar_lea.vmem [#allocation2], %s181
          %s184 = ssub.s32 64, 64
          %185 = vsyncadd %s179, %s184
          %s186 = smul.addr %s23, 2
          %s187 = sadd.s32 %s24, %s186
          %s188 = smul.addr %s187, 64
          %s189 = scalar_lea.hbm %s0, %s188
          %s191 = sshll.u32 %s182, 4
          %s192 = int_to_ptr.vmem [resolvable:$true] %s191
          %194 = dma.hbm_to_vmem [thread:$0]  %s189, 64, %s192, %s179
        $region32: #{tpu_custom_call.1} parent=27 // pred_fallthru
          _
      $region28: #{tpu_custom_call.1} parent=5 // pred_fallthru
        _
      %p195 = scmp.le.s32.totalorder 1, %s16
      %p196 = scmp.lt.s32.totalorder %s16, 5
      %p197 = pnand %p195, %p196
      %p198 = pneg %p197
      // Predicated region
      $region33: #{tpu_custom_call.1} parent=5 // pred_check
        _
      $region34: #{tpu_custom_call.1} parent=5 // pred_check_branch
        %200 = sbr.rel (%p197) target = $region36
      $region35: #{tpu_custom_call.1} parent=5 // pred_region
        %s201 = ssub.s32 %s16, 1
        %s202 = sand.u32 %s43, 1
        %s203 = scalar_lea.sflag [#allocation3], %s202
        %s204 = sand.u32 %s43, 1
        %s205 = smul.addr %s204, 4
        %s206 = scalar_lea.vmem [#allocation2], %s205
        // Predicated region
        $region37: #{tpu_custom_call.1} parent=35 // pred_check
          %p207 = pneg %p56
        $region38: #{tpu_custom_call.1} parent=35 // pred_check_branch
          %209 = sbr.rel (%p207) target = $region40
        $region39: #{tpu_custom_call.1} parent=35 // pred_region
          %210 = dma.done %s203, 64
        $region40: #{tpu_custom_call.1} parent=35 // pred_fallthru
          _
        %s211 = sand.u32 %s43, 1
        %s212 = scalar_lea.sflag [#allocation3], %s211
        %s213 = sand.u32 %s43, 1
        %s214 = smul.addr %s213, 4
        %s215 = scalar_lea.vmem [#allocation2], %s214
        %p216 = pneg %p56
        %p217 = pneg %p53
        %p218 = pneg %p77
        %p219 = pneg %p74
        %p220 = pneg %p98
        %p221 = pneg %p95
        %p222 = pneg %p119
        %p223 = pneg %p116
        %p224 = pneg %p147
        %p225 = pneg %p144
        %s226 = sand.u32 %s134, 1
        %s227 = scalar_lea.sflag [#allocation4], %s226
        %s228 = sand.u32 %s134, 1
        %s229 = smul.addr %s228, 4
        %s230 = scalar_lea.vmem [#allocation5], %s229
        %v231 = vld [vmem:[%s206] sm:$0xf]
        %vm232 = vcmask 1043456
        %v233 = vsel %vm232, %v231, 0.0
        %v234 = vrot.slane %v233, 4
        %v235 = vadd.f32 %v233, %v234
        %v236 = vrot.slane %v235, 2
        %v237 = vadd.f32 %v235, %v236
        %v238 = vrot.slane %v237, 1
        %v239 = vadd.f32 %v237, %v238
        %v240 = vmul.f32 %v239, 0.25
        %v241 = vmul.f32 %v231, %v231
        %v242 = vsel %vm232, %v241, 0.0
        %v243 = vrot.slane %v242, 4
        %v244 = vadd.f32 %v242, %v243
        %v245 = vrot.slane %v244, 2
        %v246 = vadd.f32 %v244, %v245
        %v247 = vrot.slane %v246, 1
        %v248 = vadd.f32 %v246, %v247
        %v249 = vmul.f32 %v248, 0.25
        %v250 = vmul.f32 %v240, %v240
        %v251 = vsub.f32 %v249, %v250
        %v252 = vmax.f32 %v251, 0.0
        %v253 = vadd.f32 %v252, 1e-05
        %v254 = vrsqrt.pop %v253
        %v255 = vld [vmem:[%s1] sm:$0xf]
        %vm256 = vcmask 31744
        %v258 = vsel %vm256, %v255, 0
        %v261 = vsel %vm232, %v231, 0
        %263 = vmatprep.subr.mxu0 0.0
        %264 = vmatpush1.msra.mxu0 %v261
        %265 = vmatprep.subr.mxu0 0.0
        %266 = vmatpush1.msra.mxu0 0.0
        %267 = vmatprep.subr.mxu0 0.0
        %268 = vmatpush1.msra.mxu0 0.0
        %269 = vmatprep.subr.mxu0 0.0
        %270 = vmatpush1.msra.mxu0 0.0
        %271 = vmatprep.subr.mxu0 0.0
        %272 = vmatpush1.msra.mxu0 0.0
        %273 = vmatprep.subr.mxu0 0.0
        %274 = vmatpush1.msra.mxu0 0.0
        %275 = vmatprep.subr.mxu0 0.0
        %276 = vmatpush1.msra.mxu0 0.0
        %277 = vmatprep.subr.mxu0 0.0
        %278 = vmatpush1.msra.mxu0 0.0
        %279 = vmatprep.subr.mxu0 0.0
        %280 = vmatpush1.msra.mxu0 0.0
        %281 = vmatprep.subr.mxu0 0.0
        %282 = vmatpush1.msra.mxu0 0.0
        %283 = vmatprep.subr.mxu0 0.0
        %284 = vmatpush1.msra.mxu0 0.0
        %285 = vmatprep.subr.mxu0 0.0
        %286 = vmatpush1.msra.mxu0 0.0
        %287 = vmatprep.subr.mxu0 0.0
        %288 = vmatpush1.msra.mxu0 0.0
        %289 = vmatprep.subr.mxu0 0.0
        %290 = vmatpush1.msra.mxu0 0.0
        %291 = vmatprep.subr.mxu0 0.0
        %292 = vmatpush1.msra.mxu0 0.0
        %293 = vmatprep.subr.mxu0 0.0
        %294 = vmatpush1.msra.mxu0 0.0
        %295 = vmatprep.subr.mxu0 0.0
        %296 = vmatpush1.msra.mxu0 0.0
        %297 = vmatprep.subr.mxu0 0.0
        %298 = vmatpush1.msra.mxu0 0.0
        %299 = vmatprep.subr.mxu0 0.0
        %300 = vmatpush1.msra.mxu0 0.0
        %301 = vmatprep.subr.mxu0 0.0
        %302 = vmatpush1.msra.mxu0 0.0
        %303 = vmatprep.subr.mxu0 0.0
        %304 = vmatpush1.msra.mxu0 0.0
        %305 = vmatprep.subr.mxu0 0.0
        %306 = vmatpush1.msra.mxu0 0.0
        %307 = vmatprep.subr.mxu0 0.0
        %308 = vmatpush1.msra.mxu0 0.0
        %309 = vmatprep.subr.mxu0 0.0
        %310 = vmatpush1.msra.mxu0 0.0
        %311 = vmatprep.subr.mxu0 0.0
        %312 = vmatpush1.msra.mxu0 0.0
        %313 = vmatprep.subr.mxu0 0.0
        %314 = vmatpush1.msra.mxu0 0.0
        %315 = vmatprep.subr.mxu0 0.0
        %316 = vmatpush1.msra.mxu0 0.0
        %317 = vmatprep.subr.mxu0 0.0
        %318 = vmatpush1.msra.mxu0 0.0
        %319 = vmatprep.subr.mxu0 0.0
        %320 = vmatpush1.msra.mxu0 0.0
        %321 = vmatprep.subr.mxu0 0.0
        %322 = vmatpush1.msra.mxu0 0.0
        %323 = vmatprep.subr.mxu0 0.0
        %324 = vmatpush1.msra.mxu0 0.0
        %325 = vmatprep.subr.mxu0 0.0
        %326 = vmatpush1.msra.mxu0 0.0
        %327 = vmatprep.mubr.f32.mxu0 0.0
        %328 = vmatmul.mubr.f32.gmra.mrb[0].mxu0 %v258
        %v329 = vpop.f32.mrb[0].mxu0
        %v330 = vadd.f32 0.0, %v329
        %v331 = vpop.f32.mrb[0].mxu0
        %332 = vdwg.mxu0
        %v333 = vmul.f32 %v330, %v254
        %v334 = vmul.f32 %v240, %v254
        %v335 = vld [vmem:[%s2] sm:$0xf]
        %337 = vset.pattern.permute.xlu0 0
        %338 = vperm.xlu0 %337, %v335
        %v339 = vpop.permute.xlu0 %338
        %v341 = vmul.f32 %v334, %v339
        %v342 = vsub.f32 %v333, %v341
        %v343 = vld [vmem:[%s3] sm:$0xf]
        %345 = vset.pattern.permute.xlu0 0
        %346 = vperm.xlu0 %345, %v343
        %v347 = vpop.permute.xlu0 %346
        %v349 = vadd.f32 %v342, %v347
        %350 = vst [vmem:[%s230] sm:$0xf] %v349
        %s351 = sand.u32 %s134, 1
        %s352 = scalar_lea.sflag [#allocation4], %s351
        %s353 = sand.u32 %s134, 1
        %s354 = smul.addr %s353, 4
        %s355 = scalar_lea.vmem [#allocation5], %s354
        // Predicated region
        $region41: #{tpu_custom_call.1} parent=35 // pred_check
          %p356 = pneg %p144
        $region42: #{tpu_custom_call.1} parent=35 // pred_check_branch
          %358 = sbr.rel (%p356) target = $region44
        $region43: #{tpu_custom_call.1} parent=35 // pred_region
          %s360 = ssub.s32 64, 64
          %361 = vsyncadd %s352, %s360
          %s362 = smul.addr %s25, 2
          %s363 = sadd.s32 %s26, %s362
          %s364 = smul.addr %s363, 64
          %s365 = scalar_lea.hbm %s4, %s364
          %s367 = sshll.u32 %s355, 4
          %s368 = int_to_ptr.vmem [resolvable:$true] %s367
          %370 = dma.vmem_to_hbm [thread:$0]  %s368, 64, %s365, %s352
        $region44: #{tpu_custom_call.1} parent=35 // pred_fallthru
          _
      $region36: #{tpu_custom_call.1} parent=5 // pred_fallthru
        _
      %p371 = scmp.le.s32.totalorder 2, %s16
      // Predicated region
      $region45: #{tpu_custom_call.1} parent=5 // pred_check
        %p372 = pneg %p371
      $region46: #{tpu_custom_call.1} parent=5 // pred_check_branch
        %374 = sbr.rel (%p372) target = $region48
      $region47: #{tpu_custom_call.1} parent=5 // pred_region
        %s375 = ssub.s32 %s16, 2
        // Predicated region
        $region49: #{tpu_custom_call.1} parent=47 // pred_check
          %p376 = pneg %p150
        $region50: #{tpu_custom_call.1} parent=47 // pred_check_branch
          %378 = sbr.rel (%p376) target = $region52
        $region51: #{tpu_custom_call.1} parent=47 // pred_region
          %s379 = sand.u32 %s135, 1
          %s380 = scalar_lea.sflag [#allocation4], %s379
          %s381 = sand.u32 %s135, 1
          %s382 = smul.addr %s381, 4
          %s383 = scalar_lea.vmem [#allocation5], %s382
          %384 = dma.done %s380, 64
        $region52: #{tpu_custom_call.1} parent=47 // pred_fallthru
          _
      $region48: #{tpu_custom_call.1} parent=5 // pred_fallthru
        _
    $region6: #{tpu_custom_call.1} parent=1 // loop_footer
      %s20 = sadd.s32 1, %s16
    $region7: #{tpu_custom_call.1} parent=1 // loop_footer_branch
      %15 = sbr.rel target = $region3
    $region8: #{tpu_custom_call.1} parent=1 // loop_exit
      _
    %385 = vsyncpa [#allocation3], 1
    %s386 = scalar_lea.sflag [#allocation3], 1
    %387 = vsyncpa %s386, 1
    %388 = vsyncpa [#allocation4], 1
    %s389 = scalar_lea.sflag [#allocation4], 1
    %390 = vsyncpa %s389, 1

</llo_original>
